<compile_context>
chip_gen: v7x
topology: tpu7x:2x2x1
jax: 0.10.0
libtpu: 0.0.40
codegen_flags: <defaults>
</compile_context>

<pallas_src>
import functools

import jax
import jax.numpy as jnp
from jax import lax
from jax.experimental import pallas as pl
from jax.experimental.pallas import tpu as pltpu

LANE = 128        # lane width (minor dim of every vreg)
TM_MAX = 512      # max sublane rows per grid step (512x128 f32 = 256 KiB / block)
NCORES = 2        # parallel grid axis: feeds both TCs on v7x, plain loop on v5e/v6e

# -log(1e-7): clamping softplus(-z) here reproduces clamp(sigmoid(z), 1e-7, 1.0)
_SP_CLAMP = 16.11809565095832


def _round_up(x, m):
    return ((x + m - 1) // m) * m


def _gce_kernel(pred_ref, lab_ref, out_ref, *, q, n_valid, block_elems,
                steps_per_core, need_mask):
    c = pl.program_id(0)   # parallel axis (core split)
    j = pl.program_id(1)   # arbitrary axis (accumulation steps)

    # Output block is indexed only by c -> VMEM-resident across j; use it
    # directly as a vreg-shaped accumulator.
    @pl.when(j == 0)
    def _():
        out_ref[...] = jnp.zeros_like(out_ref)

    pred = pred_ref[...].astype(jnp.float32)
    lab = lab_ref[...].astype(jnp.float32)          # {0, 1}
    # label select without a mask: z = pred if lab==1 else -pred
    # (uses 1 - sigmoid(x) == sigmoid(-x); exact for binary labels)
    z = (lab + lab - 1.0) * pred
    # clamp(sigmoid(z), 1e-7, 1)**q == exp(-q * min(softplus(-z), -log(1e-7)))
    sp = jnp.minimum(jnp.log(1.0 + jnp.exp(-z)), _SP_CLAMP)
    gce = (1.0 - jnp.exp((-q) * sp)) * (1.0 / q)

    if need_mask:
        blk = c * steps_per_core + j                 # global block index
        crosses_end = (blk + 1) * block_elems > n_valid

        @pl.when(jnp.logical_not(crosses_end))
        def _():                                     # interior block: no mask work
            out_ref[...] += gce

        @pl.when(crosses_end)
        def _():                                     # boundary / all-padding blocks only
            row = lax.broadcasted_iota(jnp.int32, gce.shape, 0)
            col = lax.broadcasted_iota(jnp.int32, gce.shape, 1)
            lin = blk * block_elems + row * LANE + col
            out_ref[...] += jnp.where(lin < n_valid, gce, 0.0)
    else:
        out_ref[...] += gce


def binary_gce(pred, labels, q=0.7):
    """pred: (N, 1) float logits, labels: (N, 1) in {0,1}. Returns scalar f32 loss."""
    pred_flat = pred.reshape(-1)
    lab_flat = labels.reshape(-1).astype(jnp.int8)   # 1 byte/label of HBM traffic
    n = int(pred_flat.shape[0])

    rows_needed = pl.cdiv(n, LANE)
    # rows per step: multiple of 32 (int8 tile-friendly), capped at TM_MAX
    tm = min(TM_MAX, _round_up(pl.cdiv(rows_needed, NCORES), 32))
    rows = _round_up(rows_needed, NCORES * tm)
    padded = rows * LANE
    steps_per_core = rows // (NCORES * tm)
    need_mask = padded != n

    if need_mask:                                    # pad only the tail
        pred_flat = jnp.pad(pred_flat, (0, padded - n))
        lab_flat = jnp.pad(lab_flat, (0, padded - n))
    pred2d = pred_flat.reshape(rows, LANE)
    lab2d = lab_flat.reshape(rows, LANE)

    kernel = functools.partial(
        _gce_kernel, q=float(q), n_valid=n, block_elems=tm * LANE,
        steps_per_core=steps_per_core, need_mask=need_mask)

    partials = pl.pallas_call(
        kernel,
        out_shape=jax.ShapeDtypeStruct((NCORES * tm, LANE), jnp.float32),
        grid=(NCORES, steps_per_core),
        in_specs=[
            pl.BlockSpec((tm, LANE), lambda c, j: (c * steps_per_core + j, 0)),
            pl.BlockSpec((tm, LANE), lambda c, j: (c * steps_per_core + j, 0)),
        ],
        out_specs=pl.BlockSpec((tm, LANE), lambda c, j: (c, 0)),
        compiler_params=pltpu.CompilerParams(
            dimension_semantics=("parallel", "arbitrary")),
    )(pred2d, lab2d)

    # Single small cross-lane reduction outside the kernel; mean via static n.
    return jnp.sum(partials) / n


def binary_gce_ref(pred, labels, q=0.7):
    """Pure-JAX reference mirroring the PyTorch loss exactly."""
    p = jax.nn.sigmoid(pred)[..., 0]
    lab = labels[..., 0].astype(jnp.int32)
    stacked = jnp.stack([1.0 - p, p], axis=-1)
    stacked = jnp.clip(stacked, 1e-7, 1.0)
    one_hot = jax.nn.one_hot(lab, 2, dtype=jnp.float32)
    gce = (1.0 - jnp.power(jnp.sum(one_hot * stacked, axis=1), q)) / q
    return gce.mean()


# TODO(synk): the MedSAM image encoder / prompt encoder / mask decoder and the
# embedding/MLP prompt modules need pretrained SAM weights and are not
# reimplemented here; this kernel covers the binary GCE training loss.

if __name__ == "__main__":
    key = jax.random.PRNGKey(0)
    # N=256: masked single-step path; N=8192: exact-fit (no mask) path;
    # N=140000: multi-step accumulation + boundary mask.
    for N in (256, 8192, 140000):
        key, k1, k2 = jax.random.split(key, 3)
        pred = jax.random.normal(k1, (N, 1), dtype=jnp.float32)
        labels = (jax.random.uniform(k2, (N, 1)) > 0.5).astype(jnp.float32)

        loss = jax.block_until_ready(binary_gce(pred, labels, q=0.7))
        ref = binary_gce_ref(pred, labels, q=0.7)
        assert jnp.allclose(loss, ref, atol=1e-5, rtol=1e-5), (N, loss, ref)

    print("KERNEL_OK")
</pallas_src>

<mosaic_0001>
module attributes {stable_mosaic.version = 11 : i64} {
  func.func @_gce_kernel(%arg0: i32, %arg1: i32, %arg2: memref<32x128xf32, #tpu.memory_space<vmem>>, %arg3: memref<32x128xi8, #tpu.memory_space<vmem>>, %arg4: memref<32x128xf32, #tpu.memory_space<vmem>>) attributes {dimension_semantics = [#tpu.dimension_semantics<parallel>, #tpu.dimension_semantics<arbitrary>], iteration_bounds = array<i64: 2, 1>, scalar_prefetch = 0 : i64, scratch_operands = 0 : i64, tpu.core_type = #tpu.core_type<tc>, window_params = [{transform_indices = @transform_0, window_bounds = array<i64: 32, 128>}, {transform_indices = @transform_1, window_bounds = array<i64: 32, 128>}, {transform_indices = @transform_2, window_bounds = array<i64: 32, 128>}]} {
    %c0_i32 = arith.constant 0 : i32
    %0 = arith.cmpi eq, %arg1, %c0_i32 : i32
    %1 = arith.extui %0 : i1 to i32
    %c0_i32_0 = arith.constant 0 : i32
    %2 = arith.cmpi ne, %1, %c0_i32_0 : i32
    scf.if %2 {
      %cst_13 = arith.constant 0.000000e+00 : f32
      %35 = vector.broadcast %cst_13 : f32 to vector<32x128xf32>
      %c0_14 = arith.constant 0 : index
      %c0_15 = arith.constant 0 : index
      %36 = vector.load %arg4[%c0_14, %c0_15] : memref<32x128xf32, #tpu.memory_space<vmem>>, vector<32x128xf32>
      tpu.vector_store %arg4[%c0_14, %c0_15], %35 {strides = array<i32>} : memref<32x128xf32, #tpu.memory_space<vmem>>, vector<32x128xf32>,
    } else {
    }
    %c0 = arith.constant 0 : index
    %c0_1 = arith.constant 0 : index
    %3 = vector.load %arg2[%c0, %c0_1] : memref<32x128xf32, #tpu.memory_space<vmem>>, vector<32x128xf32>
    %c0_2 = arith.constant 0 : index
    %c0_3 = arith.constant 0 : index
    %4 = vector.load %arg3[%c0_2, %c0_3] : memref<32x128xi8, #tpu.memory_space<vmem>>, vector<32x128xi8>
    %5 = arith.sitofp %4 : vector<32x128xi8> to vector<32x128xf32>
    %6 = arith.addf %5, %5 : vector<32x128xf32>
    %cst = arith.constant 1.000000e+00 : f32
    %7 = vector.broadcast %cst : f32 to vector<32x128xf32>
    %8 = arith.subf %6, %7 : vector<32x128xf32>
    %9 = arith.mulf %8, %3 : vector<32x128xf32>
    %cst_4 = arith.constant 0.000000e+00 : f32
    %10 = vector.broadcast %cst_4 : f32 to vector<32x128xf32>
    %11 = arith.subf %10, %9 : vector<32x128xf32>
    %12 = math.exp %11 : vector<32x128xf32>
    %cst_5 = arith.constant 1.000000e+00 : f32
    %13 = vector.broadcast %cst_5 : f32 to vector<32x128xf32>
    %14 = arith.addf %13, %12 : vector<32x128xf32>
    %15 = math.log %14 : vector<32x128xf32>
    %cst_6 = arith.constant 16.1180954 : f32
    %16 = vector.broadcast %cst_6 : f32 to vector<32x128xf32>
    %17 = arith.minimumf %15, %16 : vector<32x128xf32>
    %cst_7 = arith.constant -0.699999988 : f32
    %18 = vector.broadcast %cst_7 : f32 to vector<32x128xf32>
    %19 = arith.mulf %18, %17 : vector<32x128xf32>
    %20 = math.exp %19 : vector<32x128xf32>
    %cst_8 = arith.constant 1.000000e+00 : f32
    %21 = vector.broadcast %cst_8 : f32 to vector<32x128xf32>
    %22 = arith.subf %21, %20 : vector<32x128xf32>
    %cst_9 = arith.constant 1.42857146 : f32
    %23 = vector.broadcast %cst_9 : f32 to vector<32x128xf32>
    %24 = arith.mulf %22, %23 : vector<32x128xf32>
    %c1_i32 = arith.constant 1 : i32
    %25 = arith.muli %arg0, %c1_i32 : i32
    %26 = arith.addi %25, %arg1 : i32
    %c1_i32_10 = arith.constant 1 : i32
    %27 = arith.addi %26, %c1_i32_10 : i32
    %c4096_i32 = arith.constant 4096 : i32
    %28 = arith.muli %27, %c4096_i32 : i32
    %c256_i32 = arith.constant 256 : i32
    %29 = arith.cmpi sgt, %28, %c256_i32 : i32
    %true = arith.constant true
    %30 = arith.xori %29, %true : i1
    %31 = arith.extui %30 : i1 to i32
    %c0_i32_11 = arith.constant 0 : i32
    %32 = arith.cmpi ne, %31, %c0_i32_11 : i32
    scf.if %32 {
      %c0_13 = arith.constant 0 : index
      %c0_14 = arith.constant 0 : index
      %35 = vector.load %arg4[%c0_13, %c0_14] : memref<32x128xf32, #tpu.memory_space<vmem>>, vector<32x128xf32>
      %36 = arith.addf %35, %24 : vector<32x128xf32>
      %c0_15 = arith.constant 0 : index
      %c0_16 = arith.constant 0 : index
      %37 = vector.load %arg4[%c0_15, %c0_16] : memref<32x128xf32, #tpu.memory_space<vmem>>, vector<32x128xf32>
      tpu.vector_store %arg4[%c0_15, %c0_16], %36 {strides = array<i32>} : memref<32x128xf32, #tpu.memory_space<vmem>>, vector<32x128xf32>,
    } else {
    }
    %33 = arith.extui %29 : i1 to i32
    %c0_i32_12 = arith.constant 0 : i32
    %34 = arith.cmpi ne, %33, %c0_i32_12 : i32
    scf.if %34 {
      %35 = tpu.iota {dimensions = array<i32: 0>} : vector<32x128xi32>
      %36 = tpu.iota {dimensions = array<i32: 1>} : vector<32x128xi32>
      %c4096_i32_13 = arith.constant 4096 : i32
      %37 = arith.muli %26, %c4096_i32_13 : i32
      %c128_i32 = arith.constant 128 : i32
      %38 = vector.broadcast %c128_i32 : i32 to vector<32x128xi32>
      %39 = arith.muli %35, %38 : vector<32x128xi32>
      %40 = vector.broadcast %37 : i32 to vector<32x128xi32>
      %41 = arith.addi %40, %39 : vector<32x128xi32>
      %42 = arith.addi %41, %36 : vector<32x128xi32>
      %c0_14 = arith.constant 0 : index
      %c0_15 = arith.constant 0 : index
      %43 = vector.load %arg4[%c0_14, %c0_15] : memref<32x128xf32, #tpu.memory_space<vmem>>, vector<32x128xf32>
      %c256_i32_16 = arith.constant 256 : i32
      %44 = vector.broadcast %c256_i32_16 : i32 to vector<32x128xi32>
      %45 = arith.cmpi slt, %42, %44 : vector<32x128xi32>
      %cst_17 = arith.constant 0.000000e+00 : f32
      %46 = vector.broadcast %cst_17 : f32 to vector<32x128xf32>
      %47 = arith.select %45, %24, %46 : vector<32x128xi1>, vector<32x128xf32>
      %48 = arith.addf %43, %47 : vector<32x128xf32>
      %c0_18 = arith.constant 0 : index
      %c0_19 = arith.constant 0 : index
      %49 = vector.load %arg4[%c0_18, %c0_19] : memref<32x128xf32, #tpu.memory_space<vmem>>, vector<32x128xf32>
      tpu.vector_store %arg4[%c0_18, %c0_19], %48 {strides = array<i32>} : memref<32x128xf32, #tpu.memory_space<vmem>>, vector<32x128xf32>,
    } else {
    }
    return
  }
  func.func @transform_0(%arg0: i32, %arg1: i32) -> (i32, i32) {
    %c1_i32 = arith.constant 1 : i32
    %0 = arith.muli %arg0, %c1_i32 : i32
    %1 = arith.addi %0, %arg1 : i32
    %c0_i32 = arith.constant 0 : i32
    %c0_i32_0 = arith.constant 0 : i32
    return %1, %c0_i32 : i32, i32
  }
  func.func @transform_1(%arg0: i32, %arg1: i32) -> (i32, i32) {
    %c1_i32 = arith.constant 1 : i32
    %0 = arith.muli %arg0, %c1_i32 : i32
    %1 = arith.addi %0, %arg1 : i32
    %c0_i32 = arith.constant 0 : i32
    %c0_i32_0 = arith.constant 0 : i32
    return %1, %c0_i32 : i32, i32
  }
  func.func @transform_2(%arg0: i32, %arg1: i32) -> (i32, i32) {
    %c0_i32 = arith.constant 0 : i32
    %c0_i32_0 = arith.constant 0 : i32
    return %arg0, %c0_i32 : i32, i32
  }
}

</mosaic_0001>

<llo_original>
// kernel: tpu_custom_call.1
$region0: #{tpu_custom_call.1}
  #allocation0 [shape = 'u32[]', space=smem, size = 0x4, offset = 0x4, fixed_abs, tag = 'smem constant byte address 0x4 - core index']
  #allocation1 [shape = 'u32[144,128]{1,0:T(1,128)}', space=vmem, size = 0x12000, scoped, tag = 'internal scratch']
  %s0 = inlined_call_operand.hbm [shape: f32[64,128], index: 0, kind: input, shape index: {}]
  %s1 = inlined_call_operand.hbm [shape: s8[64,128], index: 1, kind: input, shape index: {}]
  %s2 = inlined_call_operand.hbm [shape: f32[64,128], index: 2, kind: output, shape index: {}]
  %s3 = sld [smem:[#allocation0]]
  $region61: #{tpu_custom_call.1} parent=0
    _
  %s5 = ssub.s32 1, %s3
  %s6 = scalar_select 0, %s5, %s3
  $region1: #{tpu_custom_call.1} parent=0
    #allocation2 [shape = 'u8[32768]{0}', space=vmem, size = 0x8000, scoped, tag = 'input window, operand 0']
    #allocation3 [shape = 's32[2]{0}', space=sflag, size = 0x8, scoped, tag = 'scoped memory for tpu_custom_call.1']
    #allocation4 [shape = 's32[2]{0}', space=sflag, size = 0x8, scoped, tag = 'scoped memory for tpu_custom_call.1']
    #allocation5 [shape = 'u8[8192]{0}', space=vmem, size = 0x2000, scoped, tag = 'input window, operand 1']
    #allocation6 [shape = 's32[2]{0}', space=sflag, size = 0x8, scoped, tag = 'scoped memory for tpu_custom_call.1']
    #allocation7 [shape = 'u8[32768]{0}', space=vmem, size = 0x8000, scoped, tag = 'output window, operand 0']
    %7 = vsyncpa [#allocation3], 0
    %s8 = scalar_lea.sflag [#allocation3], 1
    %9 = vsyncpa %s8, 0
    %10 = vsyncpa [#allocation6], 0
    %s11 = scalar_lea.sflag [#allocation6], 1
    %12 = vsyncpa %s11, 0
    %13 = vsyncpa [#allocation4], 0
    %s14 = scalar_lea.sflag [#allocation4], 1
    %15 = vsyncpa %s14, 0
    loop: start=0, step=1, limit=4
    $region2: #{tpu_custom_call.1} parent=1 // loop_pre_header
      _
    $region3: #{tpu_custom_call.1} parent=1 // loop_header
      %s17 = sphi 0, %s21
      %p18 = scmp.ge.s32.totalorder %s17, 4
      %s24 = sphi 0, %s36
      %s25 = sphi 0, %s32
      %s26 = sphi 0, %s24
      %s27 = sphi 0, %s25
      %s28 = sphi 0, %s26
      %s29 = sphi 0, %s27
      %s41 = sphi 0, %s43
      %s44 = sphi 0, %s41
      %s45 = sphi 0, %s44
      %s61 = sphi 0, %s45
      %s69 = sphi 0, %s71
      %s72 = sphi 0, %s69
      %s73 = sphi 0, %s72
      %s89 = sphi 0, %s73
      %s95 = sphi 0, %s97
      %s98 = sphi 0, %s95
      %s99 = sphi 0, %s98
      %s115 = sphi 0, %s99
    $region4: #{tpu_custom_call.1} parent=1 // loop_header_branch
      %20 = sbr.rel (%p18) target = $region8
    $region5: #{tpu_custom_call.1} parent=1 // loop_body
      %s22 = ssub.s32 %s17, 1
      %s23 = ssub.s32 %s17, 2
      %s30 = sadd.s32 1, %s25
      %p31 = scmp.ge.s32.totalorder %s30, 1
      %s32 = scalar_select %p31, 0, %s30
      %s33 = sadd.s32 1, %s24
      %s34 = scalar_select %p31, %s33, %s24
      %p35 = scmp.ge.s32.totalorder %s34, 2
      %s36 = scalar_select %p35, 0, %s34
      %s37 = sadd.s32 %s24, %s25
      %s38 = sadd.s32 %s36, %s32
      %s39 = ssub.s32 %s37, %s38
      %p40 = scmp.eq.s32.totalorder %s39, 0
      %s42 = sadd.s32 %s41, 1
      %s43 = scalar_select %p40, %s41, %s42
      %p46 = pneg %p40
      %p47 = scmp.eq.s32.totalorder %s17, 1
      %p48 = por %p46, %p47
      %p49 = scmp.ne.s32.totalorder %s41, %s44
      %p50 = scmp.eq.s32.totalorder %s17, 0
      %p51 = por %p49, %p50
      %p52 = scmp.ne.s32.totalorder %s41, %s44
      %p53 = scmp.eq.s32.totalorder %s22, 1
      %p54 = por %p52, %p53
      %p55 = scmp.ne.s32.totalorder %s44, %s45
      %p56 = scmp.eq.s32.totalorder %s22, 0
      %p57 = por %p55, %p56
      %p58 = scmp.ne.s32.totalorder %s44, %s45
      %p59 = scmp.eq.s32.totalorder %s23, 1
      %p60 = por %p58, %p59
      %p62 = scmp.ne.s32.totalorder %s45, %s61
      %p63 = scmp.eq.s32.totalorder %s23, 0
      %p64 = por %p62, %p63
      %s65 = sadd.s32 %s24, %s25
      %s66 = sadd.s32 %s36, %s32
      %s67 = ssub.s32 %s65, %s66
      %p68 = scmp.eq.s32.totalorder %s67, 0
      %s70 = sadd.s32 %s69, 1
      %s71 = scalar_select %p68, %s69, %s70
      %p74 = pneg %p68
      %p75 = scmp.eq.s32.totalorder %s17, 1
      %p76 = por %p74, %p75
      %p77 = scmp.ne.s32.totalorder %s69, %s72
      %p78 = scmp.eq.s32.totalorder %s17, 0
      %p79 = por %p77, %p78
      %p80 = scmp.ne.s32.totalorder %s69, %s72
      %p81 = scmp.eq.s32.totalorder %s22, 1
      %p82 = por %p80, %p81
      %p83 = scmp.ne.s32.totalorder %s72, %s73
      %p84 = scmp.eq.s32.totalorder %s22, 0
      %p85 = por %p83, %p84
      %p86 = scmp.ne.s32.totalorder %s72, %s73
      %p87 = scmp.eq.s32.totalorder %s23, 1
      %p88 = por %p86, %p87
      %p90 = scmp.ne.s32.totalorder %s73, %s89
      %p91 = scmp.eq.s32.totalorder %s23, 0
      %p92 = por %p90, %p91
      %s93 = ssub.s32 %s24, %s36
      %p94 = scmp.eq.s32.totalorder %s93, 0
      %s96 = sadd.s32 %s95, 1
      %s97 = scalar_select %p94, %s95, %s96
      %p100 = pneg %p94
      %p101 = scmp.eq.s32.totalorder %s17, 1
      %p102 = por %p100, %p101
      %p103 = scmp.ne.s32.totalorder %s95, %s98
      %p104 = scmp.eq.s32.totalorder %s17, 0
      %p105 = por %p103, %p104
      %p106 = scmp.ne.s32.totalorder %s95, %s98
      %p107 = scmp.eq.s32.totalorder %s22, 1
      %p108 = por %p106, %p107
      %p109 = scmp.ne.s32.totalorder %s98, %s99
      %p110 = scmp.eq.s32.totalorder %s22, 0
      %p111 = por %p109, %p110
      %p112 = scmp.ne.s32.totalorder %s98, %s99
      %p113 = scmp.eq.s32.totalorder %s23, 1
      %p114 = por %p112, %p113
      %p116 = scmp.ne.s32.totalorder %s99, %s115
      %p117 = scmp.eq.s32.totalorder %s23, 0
      %p118 = por %p116, %p117
      %p119 = scmp.le.s32.totalorder 1, %s17
      %p120 = scmp.lt.s32.totalorder %s17, 3
      %p121 = pnand %p119, %p120
      %p122 = pneg %p121
      // Predicated region
      $region9: #{tpu_custom_call.1} parent=5 // pred_check
        _
      $region10: #{tpu_custom_call.1} parent=5 // pred_check_branch
        %124 = sbr.rel (%p121) target = $region12
      $region11: #{tpu_custom_call.1} parent=5 // pred_region
        %s125 = ssub.s32 %s17, 1
      $region12: #{tpu_custom_call.1} parent=5 // pred_fallthru
        _
      %p126 = scmp.lt.s32.totalorder %s17, 2
      // Predicated region
      $region13: #{tpu_custom_call.1} parent=5 // pred_check
        %p127 = pneg %p126
      $region14: #{tpu_custom_call.1} parent=5 // pred_check_branch
        %129 = sbr.rel (%p127) target = $region16
      $region15: #{tpu_custom_call.1} parent=5 // pred_region
        // Predicated region
        $region17: #{tpu_custom_call.1} parent=15 // pred_check
          %p130 = pneg %p51
        $region18: #{tpu_custom_call.1} parent=15 // pred_check_branch
          %132 = sbr.rel (%p130) target = $region20
        $region19: #{tpu_custom_call.1} parent=15 // pred_region
          %s133 = sand.u32 %s41, 1
          %s134 = scalar_lea.sflag [#allocation3], %s133
          %s135 = sand.u32 %s41, 1
          %s136 = smul.addr %s135, 32
          %s137 = scalar_lea.vmem [#allocation2], %s136
          %s138 = sadd.s32 %s24, %s25
          %s139 = smul.u32 4, %s138
          %s141 = ssub.s32 512, 512
          %142 = vsyncadd %s134, %s141
          %s143 = smul.addr %s139, 128
          %s144 = scalar_lea.hbm %s0, %s143
          %s145 = sshll.u32 %s137, 4
          %s146 = int_to_ptr.vmem [resolvable:$true] %s145
          %151 = dma.hbm_to_vmem [thread:$0]  %s144, 512, %s146, %s134, 128, 128, 8
        $region20: #{tpu_custom_call.1} parent=15 // pred_fallthru
          _
        // Predicated region
        $region21: #{tpu_custom_call.1} parent=15 // pred_check
          %p152 = pneg %p79
        $region22: #{tpu_custom_call.1} parent=15 // pred_check_branch
          %154 = sbr.rel (%p152) target = $region24
        $region23: #{tpu_custom_call.1} parent=15 // pred_region
          %s155 = sand.u32 %s69, 1
          %s156 = scalar_lea.sflag [#allocation6], %s155
          %s157 = sand.u32 %s69, 1
          %s158 = smul.addr %s157, 8
          %s159 = scalar_lea.vmem [#allocation5], %s158
          %s160 = sadd.s32 %s24, %s25
          %s162 = ssub.s32 128, 128
          %163 = vsyncadd %s156, %s162
          %s164 = smul.addr %s160, 128
          %s165 = scalar_lea.hbm %s1, %s164
          %s167 = sshll.u32 %s159, 4
          %s168 = int_to_ptr.vmem [resolvable:$true] %s167
          %170 = dma.hbm_to_vmem [thread:$0]  %s165, 128, %s168, %s156
        $region24: #{tpu_custom_call.1} parent=15 // pred_fallthru
          _
      $region16: #{tpu_custom_call.1} parent=5 // pred_fallthru
        _
      %p171 = scmp.le.s32.totalorder 1, %s17
      %p172 = scmp.lt.s32.totalorder %s17, 3
      %p173 = pnand %p171, %p172
      %p174 = pneg %p173
      // Predicated region
      $region25: #{tpu_custom_call.1} parent=5 // pred_check
        _
      $region26: #{tpu_custom_call.1} parent=5 // pred_check_branch
        %176 = sbr.rel (%p173) target = $region28
      $region27: #{tpu_custom_call.1} parent=5 // pred_region
        %s177 = ssub.s32 %s17, 1
        %s178 = sand.u32 %s44, 1
        %s179 = scalar_lea.sflag [#allocation3], %s178
        %s180 = sand.u32 %s44, 1
        %s181 = smul.addr %s180, 32
        %s182 = scalar_lea.vmem [#allocation2], %s181
        // Predicated region
        $region29: #{tpu_custom_call.1} parent=27 // pred_check
          %p183 = pneg %p57
        $region30: #{tpu_custom_call.1} parent=27 // pred_check_branch
          %185 = sbr.rel (%p183) target = $region32
        $region31: #{tpu_custom_call.1} parent=27 // pred_region
          %186 = dma.done %s179, 512
        $region32: #{tpu_custom_call.1} parent=27 // pred_fallthru
          _
        %s187 = sand.u32 %s72, 1
        %s188 = scalar_lea.sflag [#allocation6], %s187
        %s189 = sand.u32 %s72, 1
        %s190 = smul.addr %s189, 8
        %s191 = scalar_lea.vmem [#allocation5], %s190
        // Predicated region
        $region33: #{tpu_custom_call.1} parent=27 // pred_check
          %p192 = pneg %p85
        $region34: #{tpu_custom_call.1} parent=27 // pred_check_branch
          %194 = sbr.rel (%p192) target = $region36
        $region35: #{tpu_custom_call.1} parent=27 // pred_region
          %195 = dma.done %s188, 128
        $region36: #{tpu_custom_call.1} parent=27 // pred_fallthru
          _
        %s196 = sand.u32 %s44, 1
        %s197 = scalar_lea.sflag [#allocation3], %s196
        %s198 = sand.u32 %s44, 1
        %s199 = smul.addr %s198, 32
        %s200 = scalar_lea.vmem [#allocation2], %s199
        %p201 = pneg %p57
        %p202 = pneg %p54
        %s203 = sand.u32 %s72, 1
        %s204 = scalar_lea.sflag [#allocation6], %s203
        %s205 = sand.u32 %s72, 1
        %s206 = smul.addr %s205, 8
        %s207 = scalar_lea.vmem [#allocation5], %s206
        %p208 = pneg %p85
        %p209 = pneg %p82
        %p210 = pneg %p111
        %p211 = pneg %p108
        %s212 = sand.u32 %s98, 1
        %s213 = scalar_lea.sflag [#allocation4], %s212
        %s214 = sand.u32 %s98, 1
        %s215 = smul.addr %s214, 32
        %s216 = scalar_lea.vmem [#allocation7], %s215
        %s217 = sadd.s32 %s26, %s27
        %s218 = smul.u32 4, %s217
        %s219 = sadd.s32 %s26, %s27
        %s220 = smul.u32 4, %s26
        %p221 = scmp.eq.s32.totalorder %s27, 0
        // Predicated region
        $region37: #{tpu_custom_call.1} parent=27 // pred_check
          %p222 = pneg %p221
        $region38: #{tpu_custom_call.1} parent=27 // pred_check_branch
          %224 = sbr.rel (%p222) target = $region40
        $region39: #{tpu_custom_call.1} parent=27 // pred_region
          %225 = vst [vmem:[%s216] sm:$0xff] 0.0
          %226 = vst [vmem:[%s216 + $0x8] sm:$0xff] 0.0
          %227 = vst [vmem:[%s216 + $0x10] sm:$0xff] 0.0
          %228 = vst [vmem:[%s216 + $0x18] sm:$0xff] 0.0
        $region40: #{tpu_custom_call.1} parent=27 // pred_fallthru
          _
        %v229 = vld [vmem:[%s182] sm:$0xff]
        %v230 = vld [vmem:[%s182 + $0x8] sm:$0xff]
        %v231 = vld [vmem:[%s182 + $0x10] sm:$0xff]
        %v232 = vld [vmem:[%s182 + $0x18] sm:$0xff]
        %v233 = vld [vmem:[%s191] sm:$0xff]
        %v234 = vunpack.c.0.s8 %v233
        %v235 = vunpack.c.1.s8 %v233
        %v236 = vunpack.c.2.s8 %v233
        %v237 = vunpack.c.3.s8 %v233
        %v238 = vcvt.s32.f32 %v234
        %v239 = vcvt.s32.f32 %v235
        %v240 = vcvt.s32.f32 %v236
        %v241 = vcvt.s32.f32 %v237
        %v242 = vadd.f32 %v238, %v238
        %v243 = vadd.f32 %v239, %v239
        %v244 = vadd.f32 %v240, %v240
        %v245 = vadd.f32 %v241, %v241
        %v246 = vsub.f32 %v242, 1.0
        %v247 = vsub.f32 %v243, 1.0
        %v248 = vsub.f32 %v244, 1.0
        %v249 = vsub.f32 %v245, 1.0
        %v250 = vmul.f32 %v246, %v229
        %v251 = vmul.f32 %v247, %v230
        %v252 = vmul.f32 %v248, %v231
        %v253 = vmul.f32 %v249, %v232
        %v254 = vsub.f32 0.0, %v250
        %v255 = vsub.f32 0.0, %v251
        %v256 = vsub.f32 0.0, %v252
        %v257 = vsub.f32 0.0, %v253
        %v258 = vmul.f32 %v254, 1.442695
        %v259 = vpow.pop %v258
        %v260 = vmul.f32 %v255, 1.442695
        %v261 = vpow.pop %v260
        %v262 = vmul.f32 %v256, 1.442695
        %v263 = vpow.pop %v262
        %v264 = vmul.f32 %v257, 1.442695
        %v265 = vpow.pop %v264
        %v266 = vadd.f32 %v259, 1.0
        %v267 = vadd.f32 %v261, 1.0
        %v268 = vadd.f32 %v263, 1.0
        %v269 = vadd.f32 %v265, 1.0
        %v270 = vlog2.pop %v266
        %v271 = vmul.f32 %v270, 0.6931472
        %v272 = vlog2.pop %v267
        %v273 = vmul.f32 %v272, 0.6931472
        %v274 = vlog2.pop %v268
        %v275 = vmul.f32 %v274, 0.6931472
        %v276 = vlog2.pop %v269
        %v277 = vmul.f32 %v276, 0.6931472
        %v278 = vmin.f32 %v271, 16.118095
        %v279 = vmin.f32 %v273, 16.118095
        %v280 = vmin.f32 %v275, 16.118095
        %v281 = vmin.f32 %v277, 16.118095
        %v282 = vmul.f32 %v278, -0.7
        %v283 = vmul.f32 %v279, -0.7
        %v284 = vmul.f32 %v280, -0.7
        %v285 = vmul.f32 %v281, -0.7
        %v286 = vmul.f32 %v282, 1.442695
        %v287 = vpow.pop %v286
        %v288 = vmul.f32 %v283, 1.442695
        %v289 = vpow.pop %v288
        %v290 = vmul.f32 %v284, 1.442695
        %v291 = vpow.pop %v290
        %v292 = vmul.f32 %v285, 1.442695
        %v293 = vpow.pop %v292
        %v294 = vsub.f32 1.0, %v287
        %v295 = vsub.f32 1.0, %v289
        %v296 = vsub.f32 1.0, %v291
        %v297 = vsub.f32 1.0, %v293
        %v298 = vmul.f32 %v294, 1.4285715
        %v299 = vmul.f32 %v295, 1.4285715
        %v300 = vmul.f32 %v296, 1.4285715
        %v301 = vmul.f32 %v297, 1.4285715
        %s302 = sadd.s32 %s26, %s27
        %s303 = sadd.s32 %s302, 1
        %s304 = smul.u32 %s303, 4096
        %p305 = scmp.gt.s32.totalorder %s304, 256
        %p306 = scmp.le.s32.totalorder %s304, 256
        // Predicated region
        $region41: #{tpu_custom_call.1} parent=27 // pred_check
          %p307 = pneg %p306
        $region42: #{tpu_custom_call.1} parent=27 // pred_check_branch
          %309 = sbr.rel (%p307) target = $region44
        $region43: #{tpu_custom_call.1} parent=27 // pred_region
          %v310 = vld [vmem:[%s216] sm:$0xff]
          %v311 = vld [vmem:[%s216 + $0x8] sm:$0xff]
          %v312 = vld [vmem:[%s216 + $0x10] sm:$0xff]
          %v313 = vld [vmem:[%s216 + $0x18] sm:$0xff]
          %v314 = vadd.f32 %v310, %v298
          %v315 = vadd.f32 %v311, %v299
          %v316 = vadd.f32 %v312, %v300
          %v317 = vadd.f32 %v313, %v301
          %318 = vst [vmem:[%s216] sm:$0xff] %v314
          %319 = vst [vmem:[%s216 + $0x8] sm:$0xff] %v315
          %320 = vst [vmem:[%s216 + $0x10] sm:$0xff] %v316
          %321 = vst [vmem:[%s216 + $0x18] sm:$0xff] %v317
        $region44: #{tpu_custom_call.1} parent=27 // pred_fallthru
          _
        // Predicated region
        $region45: #{tpu_custom_call.1} parent=27 // pred_check
          %p322 = pneg %p305
        $region46: #{tpu_custom_call.1} parent=27 // pred_check_branch
          %324 = sbr.rel (%p322) target = $region48
        $region47: #{tpu_custom_call.1} parent=27 // pred_region
          %v325 = vlaneseq
          %v326 = vshrl.u32 %v325, 7
          %v327 = vadd.s32 %v326, 8
          %v328 = vadd.s32 %v326, 16
          %v329 = vadd.s32 %v326, 24
          %v330 = vlaneseq
          %v331 = vand.u32 %v330, 127
          %s332 = smul.u32 %s302, 4096
          %v333 = vmul.u32 %v326, 128
          %v334 = vmul.u32 %v327, 128
          %v335 = vmul.u32 %v328, 128
          %v336 = vmul.u32 %v329, 128
          %v337 = vstv %s332
          %v338 = vadd.s32 %v337, %v333
          %v339 = vadd.s32 %v337, %v334
          %v340 = vadd.s32 %v337, %v335
          %v341 = vadd.s32 %v337, %v336
          %v342 = vadd.s32 %v338, %v331
          %v343 = vadd.s32 %v339, %v331
          %v344 = vadd.s32 %v340, %v331
          %v345 = vadd.s32 %v341, %v331
          %v346 = vld [vmem:[%s216] sm:$0xff]
          %v347 = vld [vmem:[%s216 + $0x8] sm:$0xff]
          %v348 = vld [vmem:[%s216 + $0x10] sm:$0xff]
          %v349 = vld [vmem:[%s216 + $0x18] sm:$0xff]
          %vm350 = vcmp.lt.s32.totalorder %v342, 256
          %vm351 = vcmp.lt.s32.totalorder %v343, 256
          %vm352 = vcmp.lt.s32.totalorder %v344, 256
          %vm353 = vcmp.lt.s32.totalorder %v345, 256
          %v354 = vsel %vm350, %v298, 0.0
          %v355 = vsel %vm351, %v299, 0.0
          %v356 = vsel %vm352, %v300, 0.0
          %v357 = vsel %vm353, %v301, 0.0
          %v358 = vadd.f32 %v346, %v354
          %v359 = vadd.f32 %v347, %v355
          %v360 = vadd.f32 %v348, %v356
          %v361 = vadd.f32 %v349, %v357
          %362 = vst [vmem:[%s216] sm:$0xff] %v358
          %363 = vst [vmem:[%s216 + $0x8] sm:$0xff] %v359
          %364 = vst [vmem:[%s216 + $0x10] sm:$0xff] %v360
          %365 = vst [vmem:[%s216 + $0x18] sm:$0xff] %v361
        $region48: #{tpu_custom_call.1} parent=27 // pred_fallthru
          _
        %s366 = sand.u32 %s98, 1
        %s367 = scalar_lea.sflag [#allocation4], %s366
        %s368 = sand.u32 %s98, 1
        %s369 = smul.addr %s368, 32
        %s370 = scalar_lea.vmem [#allocation7], %s369
        // Predicated region
        $region49: #{tpu_custom_call.1} parent=27 // pred_check
          %p371 = pneg %p108
        $region50: #{tpu_custom_call.1} parent=27 // pred_check_branch
          %373 = sbr.rel (%p371) target = $region52
        $region51: #{tpu_custom_call.1} parent=27 // pred_region
          %s374 = smul.u32 4, %s26
          %s376 = ssub.s32 512, 512
          %377 = vsyncadd %s367, %s376
          %s378 = smul.addr %s374, 128
          %s379 = scalar_lea.hbm %s2, %s378
          %s380 = sshll.u32 %s370, 4
          %s381 = int_to_ptr.vmem [resolvable:$true] %s380
          %386 = dma.vmem_to_hbm [thread:$0]  %s381, 512, %s379, %s367, 128, 128, 8
        $region52: #{tpu_custom_call.1} parent=27 // pred_fallthru
          _
      $region28: #{tpu_custom_call.1} parent=5 // pred_fallthru
        _
      %p387 = scmp.le.s32.totalorder 2, %s17
      // Predicated region
      $region53: #{tpu_custom_call.1} parent=5 // pred_check
        %p388 = pneg %p387
      $region54: #{tpu_custom_call.1} parent=5 // pred_check_branch
        %390 = sbr.rel (%p388) target = $region56
      $region55: #{tpu_custom_call.1} parent=5 // pred_region
        %s391 = ssub.s32 %s17, 2
        // Predicated region
        $region57: #{tpu_custom_call.1} parent=55 // pred_check
          %p392 = pneg %p114
        $region58: #{tpu_custom_call.1} parent=55 // pred_check_branch
          %394 = sbr.rel (%p392) target = $region60
        $region59: #{tpu_custom_call.1} parent=55 // pred_region
          %s395 = sand.u32 %s99, 1
          %s396 = scalar_lea.sflag [#allocation4], %s395
          %s397 = sand.u32 %s99, 1
          %s398 = smul.addr %s397, 32
          %s399 = scalar_lea.vmem [#allocation7], %s398
          %400 = dma.done %s396, 512
        $region60: #{tpu_custom_call.1} parent=55 // pred_fallthru
          _
      $region56: #{tpu_custom_call.1} parent=5 // pred_fallthru
        _
    $region6: #{tpu_custom_call.1} parent=1 // loop_footer
      %s21 = sadd.s32 1, %s17
    $region7: #{tpu_custom_call.1} parent=1 // loop_footer_branch
      %16 = sbr.rel target = $region3
    $region8: #{tpu_custom_call.1} parent=1 // loop_exit
      _
    %401 = vsyncpa [#allocation3], 1
    %s402 = scalar_lea.sflag [#allocation3], 1
    %403 = vsyncpa %s402, 1
    %404 = vsyncpa [#allocation6], 1
    %s405 = scalar_lea.sflag [#allocation6], 1
    %406 = vsyncpa %s405, 1
    %407 = vsyncpa [#allocation4], 1
    %s408 = scalar_lea.sflag [#allocation4], 1
    %409 = vsyncpa %s408, 1

</llo_original>
